<compile_context>
chip_gen: v5e
topology: v5e:2x2
jax: 0.10.0
libtpu: 0.0.40
codegen_flags: <defaults>
</compile_context>

<pallas_src>
import math

import jax
import jax.numpy as jnp
from jax.experimental import pallas as pl
from jax.experimental.pallas import tpu as pltpu  # noqa: F401  (TPU backend assumed)

# -- problem sizes (small, consistent with the module) ------------------------
B = 2            # batch
S = 16           # sequence length (tokens)
C_IN = 32        # in_channels  (must equal out_channels for the residual add,
C_OUT = 32       #               exactly as the PyTorch module implicitly needs)
HEADS = 8        # num_heads
HEAD_DIM = C_OUT // HEADS   # 4
FFN = 4 * C_OUT
EPS = 1e-5       # nn.LayerNorm default
BS = B * S
NEG = -1e30      # additive mask value for cross-batch attention pairs


def _layernorm(x, gamma, beta):
    mu = jnp.mean(x, axis=-1, keepdims=True)
    var = jnp.mean((x - mu) ** 2, axis=-1, keepdims=True)
    return (x - mu) * jax.lax.rsqrt(var + EPS) * gamma + beta


# -----------------------------------------------------------------------------
# Kernel: single invocation, whole (B*S) token slab.  All matmuls (fused QKV,
# attention, combine, FFN) and both layernorms live inside the kernel.
# -----------------------------------------------------------------------------
def transformer_kernel(x2_ref, xt_ref, wqkvt_ref, bqkvt_ref, mask_ref,
                       cw_ref, cb_ref, f1w_ref, f1b_ref, f2w_ref, f2b_ref,
                       g1_ref, be1_ref, g2_ref, be2_ref,
                       o_ref):
    x2 = x2_ref[...]                                       # (BS, C) f32 residual path

    # Fused Q|K|V projection in transposed layout (features on sublanes, tokens
    # on lanes): (3*C_OUT, C_IN)bf16 @ (C_IN, BS)bf16 -> f32.  q rows already
    # carry the 1/sqrt(head_dim) scale (folded in the wrapper).
    qkv_t = jnp.dot(wqkvt_ref[...], xt_ref[...],
                    preferred_element_type=jnp.float32) + bqkvt_ref[...]   # (3C, BS)

    mask = mask_ref[...]                                   # (BS, BS) block-diag additive

    outs = []
    for d in range(HEAD_DIM):          # head_dim is the attention batch axis (4, unrolled)
        lo = d * HEADS
        qd = qkv_t[lo:lo + HEADS, :].astype(jnp.bfloat16)                     # (H, BS)
        kd = qkv_t[C_OUT + lo:C_OUT + lo + HEADS, :].astype(jnp.bfloat16)     # (H, BS)
        vd = qkv_t[2 * C_OUT + lo:2 * C_OUT + lo + HEADS, :].astype(jnp.bfloat16)
        # scores over all tokens of all batch elements; cross-batch pairs masked off.
        s = jax.lax.dot_general(qd, kd, (((0,), (0,)), ((), ())),
                                preferred_element_type=jnp.float32)           # (BS, BS)
        s = s + mask
        s = s - jnp.max(s, axis=-1, keepdims=True)         # stable softmax
        e = jnp.exp(s)
        p = e * pl.reciprocal(jnp.sum(e, axis=-1, keepdims=True), approx=True)
        # TODO(synk): attn_dropout / FFN dropout are eval-mode identities here.
        outs.append(jax.lax.dot_general(p.astype(jnp.bfloat16), vd,
                                        (((1,), (1,)), ((), ())),
                                        preferred_element_type=jnp.float32))  # (BS, H)

    # Column order d*HEADS + h == the PyTorch permute(0,2,1,3).reshape flattening.
    attn = jnp.concatenate(outs, axis=-1)                  # (BS, C_OUT)

    comb = jnp.dot(attn.astype(jnp.bfloat16), cw_ref[...],
                   preferred_element_type=jnp.float32) + cb_ref[...]
    y1 = _layernorm(x2 + comb, g1_ref[...], be1_ref[...])  # norm1(res1(x)+attn)

    h = jnp.maximum(jnp.dot(y1.astype(jnp.bfloat16), f1w_ref[...],
                            preferred_element_type=jnp.float32) + f1b_ref[...],
                    0.0)                                   # (BS, 4*C_OUT), ReLU
    ffn = jnp.dot(h.astype(jnp.bfloat16), f2w_ref[...],
                  preferred_element_type=jnp.float32) + f2b_ref[...]
    o_ref[...] = _layernorm(y1 + ffn, g2_ref[...], be2_ref[...])


# -----------------------------------------------------------------------------
# Wrapper (glue): head permutation, scale folding, QKV fusion/transpose, bf16
# weight casts, batch flattening, mask construction, pallas_call.
# -----------------------------------------------------------------------------
def transformer_forward(x, params):
    (qw, qb, kw, kb, vw, vb, cw, cb,
     f1w, f1b, f2w, f2b, g1, b1, g2, b2) = params
    assert C_IN == C_OUT, "residual add requires in_channels == out_channels"

    # PyTorch q/k/v output channel h*HEAD_DIM + d  ->  kernel order d*HEADS + h.
    perm = jnp.array(
        [h * HEAD_DIM + d for d in range(HEAD_DIM) for h in range(HEADS)],
        dtype=jnp.int32)
    inv_scale = 1.0 / math.sqrt(HEAD_DIM)                  # fold q / sqrt(head_dim)
    qw_p, qb_p = (qw * inv_scale)[:, perm], (qb * inv_scale)[perm]
    kw_p, kb_p = kw[:, perm], kb[perm]
    vw_p, vb_p = vw[:, perm], vb[perm]

    # Fused Q|K|V weights, transposed layout: (3*C_OUT, C_IN) bf16, bias (3*C_OUT, 1) f32.
    wqkv_t = jnp.concatenate([qw_p.T, kw_p.T, vw_p.T], axis=0).astype(jnp.bfloat16)
    bqkv_t = jnp.concatenate([qb_p, kb_p, vb_p]).reshape(-1, 1).astype(jnp.float32)

    # Batch fused into one kernel invocation: rows are (b, s) tokens, b-major.
    x2 = x.reshape(BS, C_IN).astype(jnp.float32)           # residual / LN path
    xt = x2.T.astype(jnp.bfloat16)                         # (C_IN, BS) for fused QKV

    # Additive block-diagonal mask keeping attention within each batch element.
    tok_b = jnp.arange(BS, dtype=jnp.int32) // S
    mask = jnp.where(tok_b[:, None] == tok_b[None, :], 0.0, NEG).astype(jnp.float32)

    row = lambda a: a.reshape(1, -1).astype(jnp.float32)   # 1-D params -> (1, N)
    bf = lambda a: a.astype(jnp.bfloat16)

    out2 = pl.pallas_call(
        transformer_kernel,
        out_shape=jax.ShapeDtypeStruct((BS, C_OUT), jnp.float32),
    )(x2, xt, wqkv_t, bqkv_t, mask,
      bf(cw), row(cb), bf(f1w), row(f1b), bf(f2w), row(f2b),
      row(g1), row(b1), row(g2), row(b2))

    return out2.reshape(B, S, C_OUT)


# -----------------------------------------------------------------------------
# Pure-JAX reference (mirrors the PyTorch forward literally, eval mode, f32).
# -----------------------------------------------------------------------------
def reference(x, params):
    (qw, qb, kw, kb, vw, vb, cw, cb,
     f1w, f1b, f2w, f2b, g1, b1, g2, b2) = params
    with jax.default_matmul_precision("highest"):
        Bq, Sq = x.shape[0], x.shape[1]
        q = x @ qw + qb
        k = x @ kw + kb
        v = x @ vw + vb
        q = q.reshape(Bq, Sq, HEADS, HEAD_DIM).transpose(0, 3, 1, 2)  # (B,D,S,H)
        k = k.reshape(Bq, Sq, HEADS, HEAD_DIM).transpose(0, 3, 1, 2)
        v = v.reshape(Bq, Sq, HEADS, HEAD_DIM).transpose(0, 3, 1, 2)
        scores = jnp.einsum('bdih,bdjh->bdij', q / math.sqrt(HEAD_DIM), k)
        w = jax.nn.softmax(scores, axis=-1)
        attn = jnp.einsum('bdij,bdjh->bdih', w, v)                    # (B,D,S,H)
        attn = attn.transpose(0, 2, 1, 3).reshape(Bq, Sq, C_OUT)
        comb = attn @ cw + cb
        y1 = _layernorm(x + comb, g1, b1)
        ffn = jnp.maximum(y1 @ f1w + f1b, 0.0) @ f2w + f2b
        return _layernorm(y1 + ffn, g2, b2)


def init_params(key):
    ks = jax.random.split(key, 12)

    def lin(kw_, kb_, fan_in, fan_out):
        w = jax.random.normal(kw_, (fan_in, fan_out), jnp.float32) * 0.1
        b = jax.random.normal(kb_, (fan_out,), jnp.float32) * 0.1
        return w, b

    qw, qb = lin(ks[0], ks[1], C_IN, C_OUT)
    kw, kb = lin(ks[2], ks[3], C_IN, C_OUT)
    vw, vb = lin(ks[4], ks[5], C_IN, C_OUT)
    cw, cb = lin(ks[6], ks[7], C_OUT, C_OUT)
    f1w, f1b = lin(ks[8], ks[9], C_OUT, FFN)
    f2w, f2b = lin(ks[10], ks[11], FFN, C_OUT)
    g1 = jnp.ones((C_OUT,), jnp.float32)
    b1 = jnp.zeros((C_OUT,), jnp.float32)
    g2 = jnp.ones((C_OUT,), jnp.float32)
    b2 = jnp.zeros((C_OUT,), jnp.float32)
    return (qw, qb, kw, kb, vw, vb, cw, cb, f1w, f1b, f2w, f2b, g1, b1, g2, b2)


if __name__ == "__main__":
    key = jax.random.PRNGKey(0)
    kx, kp = jax.random.split(key)
    x = jax.random.normal(kx, (B, S, C_IN), jnp.float32)
    params = init_params(kp)

    out = transformer_forward(x, params)
    out = jax.block_until_ready(out)

    ref = reference(x, params)
    assert out.shape == (B, S, C_OUT), out.shape
    # Kernel matmuls use bf16 inputs with f32 accumulation (MXU-native); compare
    # against the f32 'highest'-precision reference with a bf16-appropriate tol.
    max_err = float(jnp.max(jnp.abs(out - ref)))
    if not bool(jnp.allclose(out, ref, atol=3e-2, rtol=3e-2)):
        raise AssertionError(f"kernel/reference mismatch, max abs err={max_err}")
    print("KERNEL_OK")
</pallas_src>

<mosaic_0001>
module attributes {stable_mosaic.version = 11 : i64} {
  func.func @transformer_kernel(%arg0: memref<32x32xf32, #tpu.memory_space<vmem>>, %arg1: memref<32x32xbf16, #tpu.memory_space<vmem>>, %arg2: memref<96x32xbf16, #tpu.memory_space<vmem>>, %arg3: memref<96x1xf32, #tpu.memory_space<vmem>>, %arg4: memref<32x32xf32, #tpu.memory_space<vmem>>, %arg5: memref<32x32xbf16, #tpu.memory_space<vmem>>, %arg6: memref<1x32xf32, #tpu.memory_space<vmem>>, %arg7: memref<32x128xbf16, #tpu.memory_space<vmem>>, %arg8: memref<1x128xf32, #tpu.memory_space<vmem>>, %arg9: memref<128x32xbf16, #tpu.memory_space<vmem>>, %arg10: memref<1x32xf32, #tpu.memory_space<vmem>>, %arg11: memref<1x32xf32, #tpu.memory_space<vmem>>, %arg12: memref<1x32xf32, #tpu.memory_space<vmem>>, %arg13: memref<1x32xf32, #tpu.memory_space<vmem>>, %arg14: memref<1x32xf32, #tpu.memory_space<vmem>>, %arg15: memref<32x32xf32, #tpu.memory_space<vmem>>) attributes {dimension_semantics = [], scalar_prefetch = 0 : i64, scratch_operands = 0 : i64, tpu.core_type = #tpu.core_type<tc>} {
    %c0 = arith.constant 0 : index
    %c0_0 = arith.constant 0 : index
    %0 = vector.load %arg0[%c0, %c0_0] : memref<32x32xf32, #tpu.memory_space<vmem>>, vector<32x32xf32>
    %c0_1 = arith.constant 0 : index
    %c0_2 = arith.constant 0 : index
    %1 = vector.load %arg2[%c0_1, %c0_2] : memref<96x32xbf16, #tpu.memory_space<vmem>>, vector<96x32xbf16>
    %c0_3 = arith.constant 0 : index
    %c0_4 = arith.constant 0 : index
    %2 = vector.load %arg1[%c0_3, %c0_4] : memref<32x32xbf16, #tpu.memory_space<vmem>>, vector<32x32xbf16>
    %cst = arith.constant dense<0.000000e+00> : vector<96x32xf32>
    %3 = tpu.matmul %1, %2, %cst {dimension_numbers = #tpu.dot_dimension_numbers<[1], [0], [0], [1], [0, 0, 1, 1], [], []>} : vector<96x32xbf16>, vector<32x32xbf16>, vector<96x32xf32> -> vector<96x32xf32>
    %c0_5 = arith.constant 0 : index
    %c0_6 = arith.constant 0 : index
    %4 = vector.load %arg3[%c0_5, %c0_6] : memref<96x1xf32, #tpu.memory_space<vmem>>, vector<96x1xf32>
    %5 = vector.broadcast %4 : vector<96x1xf32> to vector<96x32xf32>
    %6 = arith.addf %3, %5 : vector<96x32xf32>
    %c0_7 = arith.constant 0 : index
    %c0_8 = arith.constant 0 : index
    %7 = vector.load %arg4[%c0_7, %c0_8] : memref<32x32xf32, #tpu.memory_space<vmem>>, vector<32x32xf32>
    %8 = vector.extract_strided_slice %6 {offsets = [0, 0], sizes = [8, 32], strides = [1, 1]} : vector<96x32xf32> to vector<8x32xf32>
    %9 = arith.truncf %8 : vector<8x32xf32> to vector<8x32xbf16>
    %10 = vector.extract_strided_slice %6 {offsets = [32, 0], sizes = [8, 32], strides = [1, 1]} : vector<96x32xf32> to vector<8x32xf32>
    %11 = arith.truncf %10 : vector<8x32xf32> to vector<8x32xbf16>
    %12 = vector.extract_strided_slice %6 {offsets = [64, 0], sizes = [8, 32], strides = [1, 1]} : vector<96x32xf32> to vector<8x32xf32>
    %13 = arith.truncf %12 : vector<8x32xf32> to vector<8x32xbf16>
    %cst_9 = arith.constant dense<0.000000e+00> : vector<32x32xf32>
    %14 = tpu.matmul %9, %11, %cst_9 {dimension_numbers = #tpu.dot_dimension_numbers<[0], [0], [1], [1], [0, 1, 1, 1], [], []>} : vector<8x32xbf16>, vector<8x32xbf16>, vector<32x32xf32> -> vector<32x32xf32>
    %15 = arith.addf %14, %7 : vector<32x32xf32>
    %cst_10 = arith.constant dense<0xFF800000> : vector<32xf32>
    %16 = vector.multi_reduction <maximumf>, %15, %cst_10 [1] : vector<32x32xf32> to vector<32xf32>
    %17 = vector.shape_cast %16 : vector<32xf32> to vector<32x1xf32>
    %18 = vector.broadcast %17 : vector<32x1xf32> to vector<32x32xf32>
    %19 = arith.subf %15, %18 : vector<32x32xf32>
    %20 = math.exp %19 : vector<32x32xf32>
    %cst_11 = arith.constant dense<0.000000e+00> : vector<32xf32>
    %21 = vector.multi_reduction <add>, %20, %cst_11 [1] : vector<32x32xf32> to vector<32xf32>
    %22 = vector.shape_cast %21 : vector<32xf32> to vector<32x1xf32>
    %23 = tpu.reciprocal %22 {approx = true} : vector<32x1xf32> -> vector<32x1xf32>
    %24 = vector.broadcast %23 : vector<32x1xf32> to vector<32x32xf32>
    %25 = arith.mulf %20, %24 : vector<32x32xf32>
    %26 = arith.truncf %25 : vector<32x32xf32> to vector<32x32xbf16>
    %cst_12 = arith.constant dense<0.000000e+00> : vector<32x8xf32>
    %27 = tpu.matmul %26, %13, %cst_12 {dimension_numbers = #tpu.dot_dimension_numbers<[1], [1], [0], [0], [0, 0, 1, 0], [], []>} : vector<32x32xbf16>, vector<8x32xbf16>, vector<32x8xf32> -> vector<32x8xf32>
    %28 = vector.extract_strided_slice %6 {offsets = [8, 0], sizes = [8, 32], strides = [1, 1]} : vector<96x32xf32> to vector<8x32xf32>
    %29 = arith.truncf %28 : vector<8x32xf32> to vector<8x32xbf16>
    %30 = vector.extract_strided_slice %6 {offsets = [40, 0], sizes = [8, 32], strides = [1, 1]} : vector<96x32xf32> to vector<8x32xf32>
    %31 = arith.truncf %30 : vector<8x32xf32> to vector<8x32xbf16>
    %32 = vector.extract_strided_slice %6 {offsets = [72, 0], sizes = [8, 32], strides = [1, 1]} : vector<96x32xf32> to vector<8x32xf32>
    %33 = arith.truncf %32 : vector<8x32xf32> to vector<8x32xbf16>
    %cst_13 = arith.constant dense<0.000000e+00> : vector<32x32xf32>
    %34 = tpu.matmul %29, %31, %cst_13 {dimension_numbers = #tpu.dot_dimension_numbers<[0], [0], [1], [1], [0, 1, 1, 1], [], []>} : vector<8x32xbf16>, vector<8x32xbf16>, vector<32x32xf32> -> vector<32x32xf32>
    %35 = arith.addf %34, %7 : vector<32x32xf32>
    %cst_14 = arith.constant dense<0xFF800000> : vector<32xf32>
    %36 = vector.multi_reduction <maximumf>, %35, %cst_14 [1] : vector<32x32xf32> to vector<32xf32>
    %37 = vector.shape_cast %36 : vector<32xf32> to vector<32x1xf32>
    %38 = vector.broadcast %37 : vector<32x1xf32> to vector<32x32xf32>
    %39 = arith.subf %35, %38 : vector<32x32xf32>
    %40 = math.exp %39 : vector<32x32xf32>
    %cst_15 = arith.constant dense<0.000000e+00> : vector<32xf32>
    %41 = vector.multi_reduction <add>, %40, %cst_15 [1] : vector<32x32xf32> to vector<32xf32>
    %42 = vector.shape_cast %41 : vector<32xf32> to vector<32x1xf32>
    %43 = tpu.reciprocal %42 {approx = true} : vector<32x1xf32> -> vector<32x1xf32>
    %44 = vector.broadcast %43 : vector<32x1xf32> to vector<32x32xf32>
    %45 = arith.mulf %40, %44 : vector<32x32xf32>
    %46 = arith.truncf %45 : vector<32x32xf32> to vector<32x32xbf16>
    %cst_16 = arith.constant dense<0.000000e+00> : vector<32x8xf32>
    %47 = tpu.matmul %46, %33, %cst_16 {dimension_numbers = #tpu.dot_dimension_numbers<[1], [1], [0], [0], [0, 0, 1, 0], [], []>} : vector<32x32xbf16>, vector<8x32xbf16>, vector<32x8xf32> -> vector<32x8xf32>
    %48 = vector.extract_strided_slice %6 {offsets = [16, 0], sizes = [8, 32], strides = [1, 1]} : vector<96x32xf32> to vector<8x32xf32>
    %49 = arith.truncf %48 : vector<8x32xf32> to vector<8x32xbf16>
    %50 = vector.extract_strided_slice %6 {offsets = [48, 0], sizes = [8, 32], strides = [1, 1]} : vector<96x32xf32> to vector<8x32xf32>
    %51 = arith.truncf %50 : vector<8x32xf32> to vector<8x32xbf16>
    %52 = vector.extract_strided_slice %6 {offsets = [80, 0], sizes = [8, 32], strides = [1, 1]} : vector<96x32xf32> to vector<8x32xf32>
    %53 = arith.truncf %52 : vector<8x32xf32> to vector<8x32xbf16>
    %cst_17 = arith.constant dense<0.000000e+00> : vector<32x32xf32>
    %54 = tpu.matmul %49, %51, %cst_17 {dimension_numbers = #tpu.dot_dimension_numbers<[0], [0], [1], [1], [0, 1, 1, 1], [], []>} : vector<8x32xbf16>, vector<8x32xbf16>, vector<32x32xf32> -> vector<32x32xf32>
    %55 = arith.addf %54, %7 : vector<32x32xf32>
    %cst_18 = arith.constant dense<0xFF800000> : vector<32xf32>
    %56 = vector.multi_reduction <maximumf>, %55, %cst_18 [1] : vector<32x32xf32> to vector<32xf32>
    %57 = vector.shape_cast %56 : vector<32xf32> to vector<32x1xf32>
    %58 = vector.broadcast %57 : vector<32x1xf32> to vector<32x32xf32>
    %59 = arith.subf %55, %58 : vector<32x32xf32>
    %60 = math.exp %59 : vector<32x32xf32>
    %cst_19 = arith.constant dense<0.000000e+00> : vector<32xf32>
    %61 = vector.multi_reduction <add>, %60, %cst_19 [1] : vector<32x32xf32> to vector<32xf32>
    %62 = vector.shape_cast %61 : vector<32xf32> to vector<32x1xf32>
    %63 = tpu.reciprocal %62 {approx = true} : vector<32x1xf32> -> vector<32x1xf32>
    %64 = vector.broadcast %63 : vector<32x1xf32> to vector<32x32xf32>
    %65 = arith.mulf %60, %64 : vector<32x32xf32>
    %66 = arith.truncf %65 : vector<32x32xf32> to vector<32x32xbf16>
    %cst_20 = arith.constant dense<0.000000e+00> : vector<32x8xf32>
    %67 = tpu.matmul %66, %53, %cst_20 {dimension_numbers = #tpu.dot_dimension_numbers<[1], [1], [0], [0], [0, 0, 1, 0], [], []>} : vector<32x32xbf16>, vector<8x32xbf16>, vector<32x8xf32> -> vector<32x8xf32>
    %68 = vector.extract_strided_slice %6 {offsets = [24, 0], sizes = [8, 32], strides = [1, 1]} : vector<96x32xf32> to vector<8x32xf32>
    %69 = arith.truncf %68 : vector<8x32xf32> to vector<8x32xbf16>
    %70 = vector.extract_strided_slice %6 {offsets = [56, 0], sizes = [8, 32], strides = [1, 1]} : vector<96x32xf32> to vector<8x32xf32>
    %71 = arith.truncf %70 : vector<8x32xf32> to vector<8x32xbf16>
    %72 = vector.extract_strided_slice %6 {offsets = [88, 0], sizes = [8, 32], strides = [1, 1]} : vector<96x32xf32> to vector<8x32xf32>
    %73 = arith.truncf %72 : vector<8x32xf32> to vector<8x32xbf16>
    %cst_21 = arith.constant dense<0.000000e+00> : vector<32x32xf32>
    %74 = tpu.matmul %69, %71, %cst_21 {dimension_numbers = #tpu.dot_dimension_numbers<[0], [0], [1], [1], [0, 1, 1, 1], [], []>} : vector<8x32xbf16>, vector<8x32xbf16>, vector<32x32xf32> -> vector<32x32xf32>
    %75 = arith.addf %74, %7 : vector<32x32xf32>
    %cst_22 = arith.constant dense<0xFF800000> : vector<32xf32>
    %76 = vector.multi_reduction <maximumf>, %75, %cst_22 [1] : vector<32x32xf32> to vector<32xf32>
    %77 = vector.shape_cast %76 : vector<32xf32> to vector<32x1xf32>
    %78 = vector.broadcast %77 : vector<32x1xf32> to vector<32x32xf32>
    %79 = arith.subf %75, %78 : vector<32x32xf32>
    %80 = math.exp %79 : vector<32x32xf32>
    %cst_23 = arith.constant dense<0.000000e+00> : vector<32xf32>
    %81 = vector.multi_reduction <add>, %80, %cst_23 [1] : vector<32x32xf32> to vector<32xf32>
    %82 = vector.shape_cast %81 : vector<32xf32> to vector<32x1xf32>
    %83 = tpu.reciprocal %82 {approx = true} : vector<32x1xf32> -> vector<32x1xf32>
    %84 = vector.broadcast %83 : vector<32x1xf32> to vector<32x32xf32>
    %85 = arith.mulf %80, %84 : vector<32x32xf32>
    %86 = arith.truncf %85 : vector<32x32xf32> to vector<32x32xbf16>
    %cst_24 = arith.constant dense<0.000000e+00> : vector<32x8xf32>
    %87 = tpu.matmul %86, %73, %cst_24 {dimension_numbers = #tpu.dot_dimension_numbers<[1], [1], [0], [0], [0, 0, 1, 0], [], []>} : vector<32x32xbf16>, vector<8x32xbf16>, vector<32x8xf32> -> vector<32x8xf32>
    %88 = tpu.concatenate %27, %47, %67, %87 in 1 : vector<32x8xf32>, vector<32x8xf32>, vector<32x8xf32>, vector<32x8xf32> -> vector<32x32xf32>
    %89 = arith.truncf %88 : vector<32x32xf32> to vector<32x32xbf16>
    %c0_25 = arith.constant 0 : index
    %c0_26 = arith.constant 0 : index
    %90 = vector.load %arg5[%c0_25, %c0_26] : memref<32x32xbf16, #tpu.memory_space<vmem>>, vector<32x32xbf16>
    %cst_27 = arith.constant dense<0.000000e+00> : vector<32x32xf32>
    %91 = tpu.matmul %89, %90, %cst_27 {dimension_numbers = #tpu.dot_dimension_numbers<[1], [0], [0], [1], [0, 0, 1, 1], [], []>} : vector<32x32xbf16>, vector<32x32xbf16>, vector<32x32xf32> -> vector<32x32xf32>
    %c0_28 = arith.constant 0 : index
    %c0_29 = arith.constant 0 : index
    %92 = vector.load %arg6[%c0_28, %c0_29] : memref<1x32xf32, #tpu.memory_space<vmem>>, vector<1x32xf32>
    %93 = vector.broadcast %92 : vector<1x32xf32> to vector<32x32xf32>
    %94 = arith.addf %91, %93 : vector<32x32xf32>
    %95 = arith.addf %0, %94 : vector<32x32xf32>
    %c0_30 = arith.constant 0 : index
    %c0_31 = arith.constant 0 : index
    %96 = vector.load %arg11[%c0_30, %c0_31] : memref<1x32xf32, #tpu.memory_space<vmem>>, vector<1x32xf32>
    %c0_32 = arith.constant 0 : index
    %c0_33 = arith.constant 0 : index
    %97 = vector.load %arg12[%c0_32, %c0_33] : memref<1x32xf32, #tpu.memory_space<vmem>>, vector<1x32xf32>
    %cst_34 = arith.constant dense<0.000000e+00> : vector<32xf32>
    %98 = vector.multi_reduction <add>, %95, %cst_34 [1] : vector<32x32xf32> to vector<32xf32>
    %99 = vector.shape_cast %98 : vector<32xf32> to vector<32x1xf32>
    %cst_35 = arith.constant 3.200000e+01 : f32
    %100 = vector.broadcast %cst_35 : f32 to vector<32x1xf32>
    %101 = arith.divf %99, %100 : vector<32x1xf32>
    %102 = vector.broadcast %101 : vector<32x1xf32> to vector<32x32xf32>
    %103 = arith.subf %95, %102 : vector<32x32xf32>
    %104 = arith.mulf %103, %103 : vector<32x32xf32>
    %cst_36 = arith.constant dense<0.000000e+00> : vector<32xf32>
    %105 = vector.multi_reduction <add>, %104, %cst_36 [1] : vector<32x32xf32> to vector<32xf32>
    %106 = vector.shape_cast %105 : vector<32xf32> to vector<32x1xf32>
    %cst_37 = arith.constant 3.200000e+01 : f32
    %107 = vector.broadcast %cst_37 : f32 to vector<32x1xf32>
    %108 = arith.divf %106, %107 : vector<32x1xf32>
    %109 = vector.broadcast %101 : vector<32x1xf32> to vector<32x32xf32>
    %110 = arith.subf %95, %109 : vector<32x32xf32>
    %cst_38 = arith.constant 9.99999974E-6 : f32
    %111 = vector.broadcast %cst_38 : f32 to vector<32x1xf32>
    %112 = arith.addf %108, %111 : vector<32x1xf32>
    %113 = math.rsqrt %112 : vector<32x1xf32>
    %114 = vector.broadcast %113 : vector<32x1xf32> to vector<32x32xf32>
    %115 = arith.mulf %110, %114 : vector<32x32xf32>
    %116 = vector.broadcast %96 : vector<1x32xf32> to vector<32x32xf32>
    %117 = arith.mulf %115, %116 : vector<32x32xf32>
    %118 = vector.broadcast %97 : vector<1x32xf32> to vector<32x32xf32>
    %119 = arith.addf %117, %118 : vector<32x32xf32>
    %120 = arith.truncf %119 : vector<32x32xf32> to vector<32x32xbf16>
    %c0_39 = arith.constant 0 : index
    %c0_40 = arith.constant 0 : index
    %121 = vector.load %arg7[%c0_39, %c0_40] : memref<32x128xbf16, #tpu.memory_space<vmem>>, vector<32x128xbf16>
    %cst_41 = arith.constant dense<0.000000e+00> : vector<32x128xf32>
    %122 = tpu.matmul %120, %121, %cst_41 {dimension_numbers = #tpu.dot_dimension_numbers<[1], [0], [0], [1], [0, 0, 1, 1], [], []>} : vector<32x32xbf16>, vector<32x128xbf16>, vector<32x128xf32> -> vector<32x128xf32>
    %c0_42 = arith.constant 0 : index
    %c0_43 = arith.constant 0 : index
    %123 = vector.load %arg8[%c0_42, %c0_43] : memref<1x128xf32, #tpu.memory_space<vmem>>, vector<1x128xf32>
    %124 = vector.broadcast %123 : vector<1x128xf32> to vector<32x128xf32>
    %125 = arith.addf %122, %124 : vector<32x128xf32>
    %cst_44 = arith.constant 0.000000e+00 : f32
    %126 = vector.broadcast %cst_44 : f32 to vector<32x128xf32>
    %127 = arith.maximumf %125, %126 : vector<32x128xf32>
    %128 = arith.truncf %127 : vector<32x128xf32> to vector<32x128xbf16>
    %c0_45 = arith.constant 0 : index
    %c0_46 = arith.constant 0 : index
    %129 = vector.load %arg9[%c0_45, %c0_46] : memref<128x32xbf16, #tpu.memory_space<vmem>>, vector<128x32xbf16>
    %cst_47 = arith.constant dense<0.000000e+00> : vector<32x32xf32>
    %130 = tpu.matmul %128, %129, %cst_47 {dimension_numbers = #tpu.dot_dimension_numbers<[1], [0], [0], [1], [0, 0, 1, 1], [], []>} : vector<32x128xbf16>, vector<128x32xbf16>, vector<32x32xf32> -> vector<32x32xf32>
    %c0_48 = arith.constant 0 : index
    %c0_49 = arith.constant 0 : index
    %131 = vector.load %arg10[%c0_48, %c0_49] : memref<1x32xf32, #tpu.memory_space<vmem>>, vector<1x32xf32>
    %132 = vector.broadcast %131 : vector<1x32xf32> to vector<32x32xf32>
    %133 = arith.addf %130, %132 : vector<32x32xf32>
    %134 = arith.addf %119, %133 : vector<32x32xf32>
    %c0_50 = arith.constant 0 : index
    %c0_51 = arith.constant 0 : index
    %135 = vector.load %arg13[%c0_50, %c0_51] : memref<1x32xf32, #tpu.memory_space<vmem>>, vector<1x32xf32>
    %c0_52 = arith.constant 0 : index
    %c0_53 = arith.constant 0 : index
    %136 = vector.load %arg14[%c0_52, %c0_53] : memref<1x32xf32, #tpu.memory_space<vmem>>, vector<1x32xf32>
    %cst_54 = arith.constant dense<0.000000e+00> : vector<32xf32>
    %137 = vector.multi_reduction <add>, %134, %cst_54 [1] : vector<32x32xf32> to vector<32xf32>
    %138 = vector.shape_cast %137 : vector<32xf32> to vector<32x1xf32>
    %cst_55 = arith.constant 3.200000e+01 : f32
    %139 = vector.broadcast %cst_55 : f32 to vector<32x1xf32>
    %140 = arith.divf %138, %139 : vector<32x1xf32>
    %141 = vector.broadcast %140 : vector<32x1xf32> to vector<32x32xf32>
    %142 = arith.subf %134, %141 : vector<32x32xf32>
    %143 = arith.mulf %142, %142 : vector<32x32xf32>
    %cst_56 = arith.constant dense<0.000000e+00> : vector<32xf32>
    %144 = vector.multi_reduction <add>, %143, %cst_56 [1] : vector<32x32xf32> to vector<32xf32>
    %145 = vector.shape_cast %144 : vector<32xf32> to vector<32x1xf32>
    %cst_57 = arith.constant 3.200000e+01 : f32
    %146 = vector.broadcast %cst_57 : f32 to vector<32x1xf32>
    %147 = arith.divf %145, %146 : vector<32x1xf32>
    %148 = vector.broadcast %140 : vector<32x1xf32> to vector<32x32xf32>
    %149 = arith.subf %134, %148 : vector<32x32xf32>
    %cst_58 = arith.constant 9.99999974E-6 : f32
    %150 = vector.broadcast %cst_58 : f32 to vector<32x1xf32>
    %151 = arith.addf %147, %150 : vector<32x1xf32>
    %152 = math.rsqrt %151 : vector<32x1xf32>
    %153 = vector.broadcast %152 : vector<32x1xf32> to vector<32x32xf32>
    %154 = arith.mulf %149, %153 : vector<32x32xf32>
    %155 = vector.broadcast %135 : vector<1x32xf32> to vector<32x32xf32>
    %156 = arith.mulf %154, %155 : vector<32x32xf32>
    %157 = vector.broadcast %136 : vector<1x32xf32> to vector<32x32xf32>
    %158 = arith.addf %156, %157 : vector<32x32xf32>
    %c0_59 = arith.constant 0 : index
    %c0_60 = arith.constant 0 : index
    %159 = vector.load %arg15[%c0_59, %c0_60] : memref<32x32xf32, #tpu.memory_space<vmem>>, vector<32x32xf32>
    tpu.vector_store %arg15[%c0_59, %c0_60], %158 {strides = array<i32>} : memref<32x32xf32, #tpu.memory_space<vmem>>, vector<32x32xf32>,
    return
  }
}

</mosaic_0001>

<llo_original>
// kernel: tpu_custom_call.1
$region0: #{tpu_custom_call.1}
  #allocation0 [shape = 'u32[]', space=smem, size = 0x4, offset = 0x4, fixed_abs, tag = 'smem constant byte address 0x4 - core index']
  #allocation1 [shape = 'u32[72,128]{1,0:T(1,128)}', space=vmem, size = 0x9000, scoped, tag = 'internal scratch']
  %s0 = inlined_call_operand.vmem [shape: f32[32,32], index: 0, kind: input, shape index: {}]
  %s1 = inlined_call_operand.vmem [shape: bf16[32,32], index: 1, kind: input, shape index: {}]
  %s2 = inlined_call_operand.vmem [shape: bf16[96,32], index: 2, kind: input, shape index: {}]
  %s3 = inlined_call_operand.vmem [shape: f32[96,1], index: 3, kind: input, shape index: {}]
  %s4 = inlined_call_operand.vmem [shape: f32[32,32], index: 4, kind: input, shape index: {}]
  %s5 = inlined_call_operand.vmem [shape: bf16[32,32], index: 5, kind: input, shape index: {}]
  %s6 = inlined_call_operand.vmem [shape: f32[1,32], index: 6, kind: input, shape index: {}]
  %s7 = inlined_call_operand.vmem [shape: bf16[32,128], index: 7, kind: input, shape index: {}]
  %s8 = inlined_call_operand.vmem [shape: f32[1,128], index: 8, kind: input, shape index: {}]
  %s9 = inlined_call_operand.vmem [shape: bf16[128,32], index: 9, kind: input, shape index: {}]
  %s10 = inlined_call_operand.vmem [shape: f32[1,32], index: 10, kind: input, shape index: {}]
  %s11 = inlined_call_operand.vmem [shape: f32[1,32], index: 11, kind: input, shape index: {}]
  %s12 = inlined_call_operand.vmem [shape: f32[1,32], index: 12, kind: input, shape index: {}]
  %s13 = inlined_call_operand.vmem [shape: f32[1,32], index: 13, kind: input, shape index: {}]
  %s14 = inlined_call_operand.vmem [shape: f32[1,32], index: 14, kind: input, shape index: {}]
  %s15 = inlined_call_operand.hbm [shape: f32[32,32], index: 15, kind: output, shape index: {}]
  %s16 = sld [smem:[#allocation0]]
  $region70: #{tpu_custom_call.1} parent=0
    _
  %s18 = ssub.s32 1, %s16
  %s19 = scalar_select 0, %s18, %s16
  $region1: #{tpu_custom_call.1} parent=0
    #allocation2 [shape = 'u8[16384]{0}', space=vmem, size = 0x4000, scoped, tag = 'output window, operand 0, single buffered']
    #allocation3 [shape = 's32[1]{0}', space=sflag, size = 0x4, scoped, tag = 'scoped memory for tpu_custom_call.1']
    %20 = vsyncpa [#allocation3], 0
    // Predicated region
    $region2: #{tpu_custom_call.1} parent=1 // pred_check
      _
    $region3: #{tpu_custom_call.1} parent=1 // pred_check_branch
      %22 = sbr.rel (0) target = $region5
    $region4: #{tpu_custom_call.1} parent=1 // pred_region
      _
    $region5: #{tpu_custom_call.1} parent=1 // pred_fallthru
      _
    // Predicated region
    $region6: #{tpu_custom_call.1} parent=1 // pred_check
      _
    $region7: #{tpu_custom_call.1} parent=1 // pred_check_branch
      %24 = sbr.rel (0) target = $region9
    $region8: #{tpu_custom_call.1} parent=1 // pred_region
      _
    $region9: #{tpu_custom_call.1} parent=1 // pred_fallthru
      _
    // Predicated region
    $region10: #{tpu_custom_call.1} parent=1 // pred_check
      _
    $region11: #{tpu_custom_call.1} parent=1 // pred_check_branch
      %26 = sbr.rel (0) target = $region13
    $region12: #{tpu_custom_call.1} parent=1 // pred_region
      _
    $region13: #{tpu_custom_call.1} parent=1 // pred_fallthru
      _
    // Predicated region
    $region14: #{tpu_custom_call.1} parent=1 // pred_check
      _
    $region15: #{tpu_custom_call.1} parent=1 // pred_check_branch
      %28 = sbr.rel (0) target = $region17
    $region16: #{tpu_custom_call.1} parent=1 // pred_region
      _
    $region17: #{tpu_custom_call.1} parent=1 // pred_fallthru
      _
    // Predicated region
    $region18: #{tpu_custom_call.1} parent=1 // pred_check
      _
    $region19: #{tpu_custom_call.1} parent=1 // pred_check_branch
      %30 = sbr.rel (0) target = $region21
    $region20: #{tpu_custom_call.1} parent=1 // pred_region
      _
    $region21: #{tpu_custom_call.1} parent=1 // pred_fallthru
      _
    // Predicated region
    $region22: #{tpu_custom_call.1} parent=1 // pred_check
      _
    $region23: #{tpu_custom_call.1} parent=1 // pred_check_branch
      %32 = sbr.rel (0) target = $region25
    $region24: #{tpu_custom_call.1} parent=1 // pred_region
      _
    $region25: #{tpu_custom_call.1} parent=1 // pred_fallthru
      _
    // Predicated region
    $region26: #{tpu_custom_call.1} parent=1 // pred_check
      _
    $region27: #{tpu_custom_call.1} parent=1 // pred_check_branch
      %34 = sbr.rel (0) target = $region29
    $region28: #{tpu_custom_call.1} parent=1 // pred_region
      _
    $region29: #{tpu_custom_call.1} parent=1 // pred_fallthru
      _
    // Predicated region
    $region30: #{tpu_custom_call.1} parent=1 // pred_check
      _
    $region31: #{tpu_custom_call.1} parent=1 // pred_check_branch
      %36 = sbr.rel (0) target = $region33
    $region32: #{tpu_custom_call.1} parent=1 // pred_region
      _
    $region33: #{tpu_custom_call.1} parent=1 // pred_fallthru
      _
    // Predicated region
    $region34: #{tpu_custom_call.1} parent=1 // pred_check
      _
    $region35: #{tpu_custom_call.1} parent=1 // pred_check_branch
      %38 = sbr.rel (0) target = $region37
    $region36: #{tpu_custom_call.1} parent=1 // pred_region
      _
    $region37: #{tpu_custom_call.1} parent=1 // pred_fallthru
      _
    // Predicated region
    $region38: #{tpu_custom_call.1} parent=1 // pred_check
      _
    $region39: #{tpu_custom_call.1} parent=1 // pred_check_branch
      %40 = sbr.rel (0) target = $region41
    $region40: #{tpu_custom_call.1} parent=1 // pred_region
      _
    $region41: #{tpu_custom_call.1} parent=1 // pred_fallthru
      _
    // Predicated region
    $region42: #{tpu_custom_call.1} parent=1 // pred_check
      _
    $region43: #{tpu_custom_call.1} parent=1 // pred_check_branch
      %42 = sbr.rel (0) target = $region45
    $region44: #{tpu_custom_call.1} parent=1 // pred_region
      _
    $region45: #{tpu_custom_call.1} parent=1 // pred_fallthru
      _
    // Predicated region
    $region46: #{tpu_custom_call.1} parent=1 // pred_check
      _
    $region47: #{tpu_custom_call.1} parent=1 // pred_check_branch
      %44 = sbr.rel (0) target = $region49
    $region48: #{tpu_custom_call.1} parent=1 // pred_region
      _
    $region49: #{tpu_custom_call.1} parent=1 // pred_fallthru
      _
    // Predicated region
    $region50: #{tpu_custom_call.1} parent=1 // pred_check
      _
    $region51: #{tpu_custom_call.1} parent=1 // pred_check_branch
      %46 = sbr.rel (0) target = $region53
    $region52: #{tpu_custom_call.1} parent=1 // pred_region
      _
    $region53: #{tpu_custom_call.1} parent=1 // pred_fallthru
      _
    // Predicated region
    $region54: #{tpu_custom_call.1} parent=1 // pred_check
      _
    $region55: #{tpu_custom_call.1} parent=1 // pred_check_branch
      %48 = sbr.rel (0) target = $region57
    $region56: #{tpu_custom_call.1} parent=1 // pred_region
      _
    $region57: #{tpu_custom_call.1} parent=1 // pred_fallthru
      _
    // Predicated region
    $region58: #{tpu_custom_call.1} parent=1 // pred_check
      _
    $region59: #{tpu_custom_call.1} parent=1 // pred_check_branch
      %50 = sbr.rel (0) target = $region61
    $region60: #{tpu_custom_call.1} parent=1 // pred_region
      _
    $region61: #{tpu_custom_call.1} parent=1 // pred_fallthru
      _
    %v52 = vld [vmem:[%s0] sm:$0xff]
    %v53 = vld [vmem:[%s0 + $0x8] sm:$0xff]
    %v54 = vld [vmem:[%s0 + $0x10] sm:$0xff]
    %v55 = vld [vmem:[%s0 + $0x18] sm:$0xff]
    %v56 = vld [vmem:[%s2] sm:$0xf]
    %v57 = vld [vmem:[%s2 + $0x4] sm:$0xf]
    %v58 = vld [vmem:[%s2 + $0x8] sm:$0xf]
    %v59 = vld [vmem:[%s2 + $0xc] sm:$0xf]
    %v60 = vld [vmem:[%s2 + $0x10] sm:$0xf]
    %v61 = vld [vmem:[%s2 + $0x14] sm:$0xf]
    %v62 = vld [vmem:[%s2 + $0x18] sm:$0xf]
    %v63 = vld [vmem:[%s2 + $0x1c] sm:$0xf]
    %v64 = vld [vmem:[%s2 + $0x20] sm:$0xf]
    %v65 = vld [vmem:[%s2 + $0x24] sm:$0xf]
    %v66 = vld [vmem:[%s2 + $0x28] sm:$0xf]
    %v67 = vld [vmem:[%s2 + $0x2c] sm:$0xf]
    %v68 = vld [vmem:[%s1] sm:$0xf]
    %v69 = vld [vmem:[%s1 + $0x4] sm:$0xf]
    %v70 = vld [vmem:[%s1 + $0x8] sm:$0xf]
    %v71 = vld [vmem:[%s1 + $0xc] sm:$0xf]
    %v72 = vld [vmem:[%s3] sm:$0xff]
    %v73 = vld [vmem:[%s3 + $0x8] sm:$0xff]
    %v74 = vld [vmem:[%s3 + $0x10] sm:$0xff]
    %v75 = vld [vmem:[%s3 + $0x18] sm:$0xff]
    %v76 = vld [vmem:[%s3 + $0x20] sm:$0xff]
    %v77 = vld [vmem:[%s3 + $0x28] sm:$0xff]
    %v78 = vld [vmem:[%s3 + $0x30] sm:$0xff]
    %v79 = vld [vmem:[%s3 + $0x38] sm:$0xff]
    %v80 = vld [vmem:[%s3 + $0x40] sm:$0xff]
    %v81 = vld [vmem:[%s3 + $0x48] sm:$0xff]
    %v82 = vld [vmem:[%s3 + $0x50] sm:$0xff]
    %v83 = vld [vmem:[%s3 + $0x58] sm:$0xff]
    %85 = vset.pattern.permute.xlu0 0
    %86 = vperm.xlu0 %85, %v72
    %v87 = vpop.permute.xlu0 %86
    %90 = vset.pattern.permute.xlu0 0
    %91 = vperm.xlu0 %90, %v73
    %v92 = vpop.permute.xlu0 %91
    %95 = vset.pattern.permute.xlu0 0
    %96 = vperm.xlu0 %95, %v74
    %v97 = vpop.permute.xlu0 %96
    %100 = vset.pattern.permute.xlu0 0
    %101 = vperm.xlu0 %100, %v75
    %v102 = vpop.permute.xlu0 %101
    %105 = vset.pattern.permute.xlu0 0
    %106 = vperm.xlu0 %105, %v76
    %v107 = vpop.permute.xlu0 %106
    %110 = vset.pattern.permute.xlu0 0
    %111 = vperm.xlu0 %110, %v77
    %v112 = vpop.permute.xlu0 %111
    %115 = vset.pattern.permute.xlu0 0
    %116 = vperm.xlu0 %115, %v78
    %v117 = vpop.permute.xlu0 %116
    %120 = vset.pattern.permute.xlu0 0
    %121 = vperm.xlu0 %120, %v79
    %v122 = vpop.permute.xlu0 %121
    %125 = vset.pattern.permute.xlu0 0
    %126 = vperm.xlu0 %125, %v80
    %v127 = vpop.permute.xlu0 %126
    %130 = vset.pattern.permute.xlu0 0
    %131 = vperm.xlu0 %130, %v81
    %v132 = vpop.permute.xlu0 %131
    %135 = vset.pattern.permute.xlu0 0
    %136 = vperm.xlu0 %135, %v82
    %v137 = vpop.permute.xlu0 %136
    %140 = vset.pattern.permute.xlu0 0
    %141 = vperm.xlu0 %140, %v83
    %v142 = vpop.permute.xlu0 %141
    %v156 = vunpack.c.l.b16 %v56
    %v157 = vunpack.c.l.b16 %v57
    %v158 = vunpack.c.l.b16 %v58
    %v159 = vunpack.c.l.b16 %v59
    %v160 = vunpack.c.l.b16 %v60
    %v161 = vunpack.c.l.b16 %v61
    %v162 = vunpack.c.l.b16 %v62
    %v163 = vunpack.c.l.b16 %v63
    %v164 = vunpack.c.l.b16 %v64
    %v165 = vunpack.c.l.b16 %v65
    %v166 = vunpack.c.l.b16 %v66
    %v167 = vunpack.c.l.b16 %v67
    %v168 = vpack.c.b16 %v157, %v156
    %v169 = vpack.c.b16 %v159, %v158
    %v170 = vpack.c.b16 %v161, %v160
    %v171 = vpack.c.b16 %v163, %v162
    %v172 = vpack.c.b16 %v165, %v164
    %v173 = vpack.c.b16 %v167, %v166
    %v178 = vunpack.c.l.b16 %v68
    %v179 = vunpack.c.l.b16 %v69
    %v180 = vunpack.c.l.b16 %v70
    %v181 = vunpack.c.l.b16 %v71
    %v182 = vpack.c.b16 %v179, %v178
    %v183 = vpack.c.b16 %v181, %v180
    %vm186 = vcmask 261120
    %v188 = vsel %vm186, %v168, 0
    %v191 = vsel %vm186, %v169, 0
    %v194 = vsel %vm186, %v170, 0
    %v197 = vsel %vm186, %v171, 0
    %v200 = vsel %vm186, %v172, 0
    %v203 = vsel %vm186, %v173, 0
    %205 = vmatpush.bf16.msra.mxu0 0
    %206 = vmatpush.bf16.msra.mxu0 0
    %207 = vmatpush.bf16.msra.mxu0 0
    %208 = vmatpush.bf16.msra.mxu0 0
    %209 = vmatpush.bf16.msra.mxu0 0
    %210 = vmatpush.bf16.msra.mxu0 0
    %211 = vmatpush.bf16.msra.mxu0 %v183
    %212 = vmatpush.bf16.msra.mxu0 %v182
    %213 = vmatmul.bf16.gmra.mxu0 %v188
    %v214 = vpop.f32.mrf.mxu0
    %v215 = vadd.f32 %v87, %v214
    %v216 = vpop.f32.mrf.mxu0
    %v217 = vadd.f32 %v92, %v216
    %218 = vmatmul.bf16.gmra.mxu0 %v191
    %v219 = vpop.f32.mrf.mxu0
    %v220 = vadd.f32 %v97, %v219
    %v221 = vpop.f32.mrf.mxu0
    %v222 = vadd.f32 %v102, %v221
    %223 = vmatmul.bf16.gmra.mxu0 %v194
    %v224 = vpop.f32.mrf.mxu0
    %v225 = vadd.f32 %v107, %v224
    %v226 = vpop.f32.mrf.mxu0
    %v227 = vadd.f32 %v112, %v226
    %228 = vmatmul.bf16.gmra.mxu0 %v197
    %v229 = vpop.f32.mrf.mxu0
    %v230 = vadd.f32 %v117, %v229
    %v231 = vpop.f32.mrf.mxu0
    %v232 = vadd.f32 %v122, %v231
    %233 = vmatmul.bf16.gmra.mxu0 %v200
    %v234 = vpop.f32.mrf.mxu0
    %v235 = vadd.f32 %v127, %v234
    %v236 = vpop.f32.mrf.mxu0
    %v237 = vadd.f32 %v132, %v236
    %238 = vmatmul.bf16.gmra.mxu0 %v203
    %v239 = vpop.f32.mrf.mxu0
    %v240 = vadd.f32 %v137, %v239
    %v241 = vpop.f32.mrf.mxu0
    %v242 = vadd.f32 %v142, %v241
    %243 = vdwg.mxu0
    %v244 = vld [vmem:[%s4] sm:$0xff]
    %v245 = vld [vmem:[%s4 + $0x8] sm:$0xff]
    %v246 = vld [vmem:[%s4 + $0x10] sm:$0xff]
    %v247 = vld [vmem:[%s4 + $0x18] sm:$0xff]
    %v248 = vpack.c.bf16 %v215, %v215
    %v249 = vpack.c.bf16 %v225, %v225
    %v250 = vpack.c.bf16 %v235, %v235
    %251 = vxpose.xlu0.c.b16.start [1/8] %v248, 128
    %252 = vxpose.xlu0.c.b16.cont [2/8] 0, 128
    %253 = vxpose.xlu0.c.b16.cont [3/8] 0, 128
    %254 = vxpose.xlu0.c.b16.cont [4/8] 0, 128
    %255 = vxpose.xlu0.c.b16.cont [5/8] 0, 128
    %256 = vxpose.xlu0.c.b16.cont [6/8] 0, 128
    %257 = vxpose.xlu0.c.b16.cont [7/8] 0, 128
    %258 = vxpose.xlu0.c.b16.end [8/8] 0, 128
    %v259 = vpop.trf.xlu0
    %v260 = vpop.trf.xlu0
    %v261 = vpop.trf.xlu0
    %v262 = vpop.trf.xlu0
    %v263 = vpop.trf.xlu0
    %v264 = vpop.trf.xlu0
    %v265 = vpop.trf.xlu0
    %v266 = vpop.trf.xlu0
    %vm267 = vcmask 64512
    %v269 = vsel %vm267, %v259, 0
    %v272 = vsel %vm267, %v260, 0
    %vm274 = vcmask 1043456
    %v276 = vsel %vm274, %v249, 0
    %278 = vmatpush.bf16.msra.mxu0 0
    %279 = vmatpush.bf16.msra.mxu0 0
    %280 = vmatpush.bf16.msra.mxu0 0
    %281 = vmatpush.bf16.msra.mxu0 0
    %282 = vmatpush.bf16.msra.mxu0 0
    %283 = vmatpush.bf16.msra.mxu0 0
    %284 = vmatpush.bf16.msra.mxu0 0
    %285 = vmatpush.bf16.msra.mxu0 %v276
    %286 = vmatmul.bf16.gmra.mxu0 %v269
    %v287 = vpop.f32.mrf.mxu0
    %v288 = vadd.f32 %v244, %v287
    %v289 = vpop.f32.mrf.mxu0
    %v290 = vadd.f32 %v245, %v289
    %291 = vmatmul.bf16.gmra.mxu0 %v272
    %v292 = vpop.f32.mrf.mxu0
    %v293 = vadd.f32 %v246, %v292
    %v294 = vpop.f32.mrf.mxu0
    %v295 = vadd.f32 %v247, %v294
    %296 = vdwg.mxu0
    %v297 = vsel %vm186, %v288, -inf
    %298 = vmax.xlane.f32.xlu0 %v297
    %v299 = vpop.xlane.xlu0 %298
    %v300 = vsel %vm186, %v290, -inf
    %301 = vmax.xlane.f32.xlu0 %v300
    %v302 = vpop.xlane.xlu0 %301
    %v303 = vsel %vm186, %v293, -inf
    %304 = vmax.xlane.f32.xlu0 %v303
    %v305 = vpop.xlane.xlu0 %304
    %v306 = vsel %vm186, %v295, -inf
    %307 = vmax.xlane.f32.xlu0 %v306
    %v308 = vpop.xlane.xlu0 %307
    %v309 = vsub.f32 %v288, %v299
    %v310 = vsub.f32 %v290, %v302
    %v311 = vsub.f32 %v293, %v305
    %v312 = vsub.f32 %v295, %v308
    %v313 = vmul.f32 %v309, 1.442695
    %v314 = vpow.pop %v313
    %v315 = vmul.f32 %v310, 1.442695
    %v316 = vpow.pop %v315
    %v317 = vmul.f32 %v311, 1.442695
    %v318 = vpow.pop %v317
    %v319 = vmul.f32 %v312, 1.442695
    %v320 = vpow.pop %v319
    %v321 = vsel %vm186, %v314, 0.0
    %322 = vadd.xlane.f32.xlu0 %v321
    %v323 = vpop.xlane.xlu0 %322
    %v324 = vsel %vm186, %v316, 0.0
    %325 = vadd.xlane.f32.xlu0 %v324
    %v326 = vpop.xlane.xlu0 %325
    %v327 = vsel %vm186, %v318, 0.0
    %328 = vadd.xlane.f32.xlu0 %v327
    %v329 = vpop.xlane.xlu0 %328
    %v330 = vsel %vm186, %v320, 0.0
    %331 = vadd.xlane.f32.xlu0 %v330
    %v332 = vpop.xlane.xlu0 %331
    %v333 = vrcp.pop %v323
    %v334 = vrcp.pop %v326
    %v335 = vrcp.pop %v329
    %v336 = vrcp.pop %v332
    %v337 = vmul.f32 %v314, %v333
    %v338 = vmul.f32 %v316, %v334
    %v339 = vmul.f32 %v318, %v335
    %v340 = vmul.f32 %v320, %v336
    %v341 = vpack.c.bf16 %v338, %v337
    %v342 = vpack.c.bf16 %v340, %v339
    %v344 = vsel %vm186, %v341, 0
    %v347 = vsel %vm186, %v342, 0
    %v350 = vsel %vm186, %v250, 0
    %352 = vmatpush.bf16.xpose.msra.mxu0 0
    %353 = vmatpush.bf16.xpose.msra.mxu0 0
    %354 = vmatpush.bf16.xpose.msra.mxu0 0
    %355 = vmatpush.bf16.xpose.msra.mxu0 0
    %356 = vmatpush.bf16.xpose.msra.mxu0 0
    %357 = vmatpush.bf16.xpose.msra.mxu0 0
    %358 = vmatpush.bf16.xpose.msra.mxu0 0
    %359 = vmatpush.bf16.xpose.msra.mxu0 %v350
    %360 = vmatmul.bf16.gmra.mxu0 %v344
    %v361 = vpop.f32.mrf.mxu0
    %v362 = vadd.f32 0.0, %v361
    %v363 = vpop.f32.mrf.mxu0
    %v364 = vadd.f32 0.0, %v363
    %365 = vmatmul.bf16.gmra.mxu0 %v347
    %v366 = vpop.f32.mrf.mxu0
    %v367 = vadd.f32 0.0, %v366
    %v368 = vpop.f32.mrf.mxu0
    %v369 = vadd.f32 0.0, %v368
    %370 = vdwg.mxu0
    %v371 = vpack.c.bf16 %v217, %v217
    %v372 = vpack.c.bf16 %v227, %v227
    %v373 = vpack.c.bf16 %v237, %v237
    %374 = vxpose.xlu0.c.b16.start [1/8] %v371, 128
    %375 = vxpose.xlu0.c.b16.cont [2/8] 0, 128
    %376 = vxpose.xlu0.c.b16.cont [3/8] 0, 128
    %377 = vxpose.xlu0.c.b16.cont [4/8] 0, 128
    %378 = vxpose.xlu0.c.b16.cont [5/8] 0, 128
    %379 = vxpose.xlu0.c.b16.cont [6/8] 0, 128
    %380 = vxpose.xlu0.c.b16.cont [7/8] 0, 128
    %381 = vxpose.xlu0.c.b16.end [8/8] 0, 128
    %v382 = vpop.trf.xlu0
    %v383 = vpop.trf.xlu0
    %v384 = vpop.trf.xlu0
    %v385 = vpop.trf.xlu0
    %v386 = vpop.trf.xlu0
    %v387 = vpop.trf.xlu0
    %v388 = vpop.trf.xlu0
    %v389 = vpop.trf.xlu0
    %v391 = vsel %vm267, %v382, 0
    %v394 = vsel %vm267, %v383, 0
    %v397 = vsel %vm274, %v372, 0
    %399 = vmatpush.bf16.msra.mxu0 0
    %400 = vmatpush.bf16.msra.mxu0 0
    %401 = vmatpush.bf16.msra.mxu0 0
    %402 = vmatpush.bf16.msra.mxu0 0
    %403 = vmatpush.bf16.msra.mxu0 0
    %404 = vmatpush.bf16.msra.mxu0 0
    %405 = vmatpush.bf16.msra.mxu0 0
    %406 = vmatpush.bf16.msra.mxu0 %v397
    %407 = vmatmul.bf16.gmra.mxu0 %v391
    %v408 = vpop.f32.mrf.mxu0
    %v409 = vadd.f32 %v244, %v408
    %v410 = vpop.f32.mrf.mxu0
    %v411 = vadd.f32 %v245, %v410
    %412 = vmatmul.bf16.gmra.mxu0 %v394
    %v413 = vpop.f32.mrf.mxu0
    %v414 = vadd.f32 %v246, %v413
    %v415 = vpop.f32.mrf.mxu0
    %v416 = vadd.f32 %v247, %v415
    %417 = vdwg.mxu0
    %v418 = vsel %vm186, %v409, -inf
    %419 = vmax.xlane.f32.xlu0 %v418
    %v420 = vpop.xlane.xlu0 %419
    %v421 = vsel %vm186, %v411, -inf
    %422 = vmax.xlane.f32.xlu0 %v421
    %v423 = vpop.xlane.xlu0 %422
    %v424 = vsel %vm186, %v414, -inf
    %425 = vmax.xlane.f32.xlu0 %v424
    %v426 = vpop.xlane.xlu0 %425
    %v427 = vsel %vm186, %v416, -inf
    %428 = vmax.xlane.f32.xlu0 %v427
    %v429 = vpop.xlane.xlu0 %428
    %v430 = vsub.f32 %v409, %v420
    %v431 = vsub.f32 %v411, %v423
    %v432 = vsub.f32 %v414, %v426
    %v433 = vsub.f32 %v416, %v429
    %v434 = vmul.f32 %v430, 1.442695
    %v435 = vpow.pop %v434
    %v436 = vmul.f32 %v431, 1.442695
    %v437 = vpow.pop %v436
    %v438 = vmul.f32 %v432, 1.442695
    %v439 = vpow.pop %v438
    %v440 = vmul.f32 %v433, 1.442695
    %v441 = vpow.pop %v440
    %v442 = vsel %vm186, %v435, 0.0
    %443 = vadd.xlane.f32.xlu0 %v442
    %v444 = vpop.xlane.xlu0 %443
    %v445 = vsel %vm186, %v437, 0.0
    %446 = vadd.xlane.f32.xlu0 %v445
    %v447 = vpop.xlane.xlu0 %446
    %v448 = vsel %vm186, %v439, 0.0
    %449 = vadd.xlane.f32.xlu0 %v448
    %v450 = vpop.xlane.xlu0 %449
    %v451 = vsel %vm186, %v441, 0.0
    %452 = vadd.xlane.f32.xlu0 %v451
    %v453 = vpop.xlane.xlu0 %452
    %v454 = vrcp.pop %v444
    %v455 = vrcp.pop %v447
    %v456 = vrcp.pop %v450
    %v457 = vrcp.pop %v453
    %v458 = vmul.f32 %v435, %v454
    %v459 = vmul.f32 %v437, %v455
    %v460 = vmul.f32 %v439, %v456
    %v461 = vmul.f32 %v441, %v457
    %v462 = vpack.c.bf16 %v459, %v458
    %v463 = vpack.c.bf16 %v461, %v460
    %v465 = vsel %vm186, %v462, 0
    %v468 = vsel %vm186, %v463, 0
    %v471 = vsel %vm186, %v373, 0
    %473 = vmatpush.bf16.xpose.msra.mxu0 0
    %474 = vmatpush.bf16.xpose.msra.mxu0 0
    %475 = vmatpush.bf16.xpose.msra.mxu0 0
    %476 = vmatpush.bf16.xpose.msra.mxu0 0
    %477 = vmatpush.bf16.xpose.msra.mxu0 0
    %478 = vmatpush.bf16.xpose.msra.mxu0 0
    %479 = vmatpush.bf16.xpose.msra.mxu0 0
    %480 = vmatpush.bf16.xpose.msra.mxu0 %v471
    %481 = vmatmul.bf16.gmra.mxu0 %v465
    %v482 = vpop.f32.mrf.mxu0
    %v483 = vadd.f32 0.0, %v482
    %v484 = vpop.f32.mrf.mxu0
    %v485 = vadd.f32 0.0, %v484
    %486 = vmatmul.bf16.gmra.mxu0 %v468
    %v487 = vpop.f32.mrf.mxu0
    %v488 = vadd.f32 0.0, %v487
    %v489 = vpop.f32.mrf.mxu0
    %v490 = vadd.f32 0.0, %v489
    %491 = vdwg.mxu0
    %v492 = vpack.c.bf16 %v220, %v220
    %v493 = vpack.c.bf16 %v230, %v230
    %v494 = vpack.c.bf16 %v240, %v240
    %495 = vxpose.xlu0.c.b16.start [1/8] %v492, 128
    %496 = vxpose.xlu0.c.b16.cont [2/8] 0, 128
    %497 = vxpose.xlu0.c.b16.cont [3/8] 0, 128
    %498 = vxpose.xlu0.c.b16.cont [4/8] 0, 128
    %499 = vxpose.xlu0.c.b16.cont [5/8] 0, 128
    %500 = vxpose.xlu0.c.b16.cont [6/8] 0, 128
    %501 = vxpose.xlu0.c.b16.cont [7/8] 0, 128
    %502 = vxpose.xlu0.c.b16.end [8/8] 0, 128
    %v503 = vpop.trf.xlu0
    %v504 = vpop.trf.xlu0
    %v505 = vpop.trf.xlu0
    %v506 = vpop.trf.xlu0
    %v507 = vpop.trf.xlu0
    %v508 = vpop.trf.xlu0
    %v509 = vpop.trf.xlu0
    %v510 = vpop.trf.xlu0
    %v512 = vsel %vm267, %v503, 0
    %v515 = vsel %vm267, %v504, 0
    %v518 = vsel %vm274, %v493, 0
    %520 = vmatpush.bf16.msra.mxu0 0
    %521 = vmatpush.bf16.msra.mxu0 0
    %522 = vmatpush.bf16.msra.mxu0 0
    %523 = vmatpush.bf16.msra.mxu0 0
    %524 = vmatpush.bf16.msra.mxu0 0
    %525 = vmatpush.bf16.msra.mxu0 0
    %526 = vmatpush.bf16.msra.mxu0 0
    %527 = vmatpush.bf16.msra.mxu0 %v518
    %528 = vmatmul.bf16.gmra.mxu0 %v512
    %v529 = vpop.f32.mrf.mxu0
    %v530 = vadd.f32 %v244, %v529
    %v531 = vpop.f32.mrf.mxu0
    %v532 = vadd.f32 %v245, %v531
    %533 = vmatmul.bf16.gmra.mxu0 %v515
    %v534 = vpop.f32.mrf.mxu0
    %v535 = vadd.f32 %v246, %v534
    %v536 = vpop.f32.mrf.mxu0
    %v537 = vadd.f32 %v247, %v536
    %538 = vdwg.mxu0
    %v539 = vsel %vm186, %v530, -inf
    %540 = vmax.xlane.f32.xlu0 %v539
    %v541 = vpop.xlane.xlu0 %540
    %v542 = vsel %vm186, %v532, -inf
    %543 = vmax.xlane.f32.xlu0 %v542
    %v544 = vpop.xlane.xlu0 %543
    %v545 = vsel %vm186, %v535, -inf
    %546 = vmax.xlane.f32.xlu0 %v545
    %v547 = vpop.xlane.xlu0 %546
    %v548 = vsel %vm186, %v537, -inf
    %549 = vmax.xlane.f32.xlu0 %v548
    %v550 = vpop.xlane.xlu0 %549
    %v551 = vsub.f32 %v530, %v541
    %v552 = vsub.f32 %v532, %v544
    %v553 = vsub.f32 %v535, %v547
    %v554 = vsub.f32 %v537, %v550
    %v555 = vmul.f32 %v551, 1.442695
    %v556 = vpow.pop %v555
    %v557 = vmul.f32 %v552, 1.442695
    %v558 = vpow.pop %v557
    %v559 = vmul.f32 %v553, 1.442695
    %v560 = vpow.pop %v559
    %v561 = vmul.f32 %v554, 1.442695
    %v562 = vpow.pop %v561
    %v563 = vsel %vm186, %v556, 0.0
    %564 = vadd.xlane.f32.xlu0 %v563
    %v565 = vpop.xlane.xlu0 %564
    %v566 = vsel %vm186, %v558, 0.0
    %567 = vadd.xlane.f32.xlu0 %v566
    %v568 = vpop.xlane.xlu0 %567
    %v569 = vsel %vm186, %v560, 0.0
    %570 = vadd.xlane.f32.xlu0 %v569
    %v571 = vpop.xlane.xlu0 %570
    %v572 = vsel %vm186, %v562, 0.0
    %573 = vadd.xlane.f32.xlu0 %v572
    %v574 = vpop.xlane.xlu0 %573
    %v575 = vrcp.pop %v565
    %v576 = vrcp.pop %v568
    %v577 = vrcp.pop %v571
    %v578 = vrcp.pop %v574
    %v579 = vmul.f32 %v556, %v575
    %v580 = vmul.f32 %v558, %v576
    %v581 = vmul.f32 %v560, %v577
    %v582 = vmul.f32 %v562, %v578
    %v583 = vpack.c.bf16 %v580, %v579
    %v584 = vpack.c.bf16 %v582, %v581
    %v586 = vsel %vm186, %v583, 0
    %v589 = vsel %vm186, %v584, 0
    %v592 = vsel %vm186, %v494, 0
    %594 = vmatpush.bf16.xpose.msra.mxu0 0
    %595 = vmatpush.bf16.xpose.msra.mxu0 0
    %596 = vmatpush.bf16.xpose.msra.mxu0 0
    %597 = vmatpush.bf16.xpose.msra.mxu0 0
    %598 = vmatpush.bf16.xpose.msra.mxu0 0
    %599 = vmatpush.bf16.xpose.msra.mxu0 0
    %600 = vmatpush.bf16.xpose.msra.mxu0 0
    %601 = vmatpush.bf16.xpose.msra.mxu0 %v592
    %602 = vmatmul.bf16.gmra.mxu0 %v586
    %v603 = vpop.f32.mrf.mxu0
    %v604 = vadd.f32 0.0, %v603
    %v605 = vpop.f32.mrf.mxu0
    %v606 = vadd.f32 0.0, %v605
    %607 = vmatmul.bf16.gmra.mxu0 %v589
    %v608 = vpop.f32.mrf.mxu0
    %v609 = vadd.f32 0.0, %v608
    %v610 = vpop.f32.mrf.mxu0
    %v611 = vadd.f32 0.0, %v610
    %612 = vdwg.mxu0
    %v613 = vpack.c.bf16 %v222, %v222
    %v614 = vpack.c.bf16 %v232, %v232
    %v615 = vpack.c.bf16 %v242, %v242
    %616 = vxpose.xlu0.c.b16.start [1/8] %v613, 128
    %617 = vxpose.xlu0.c.b16.cont [2/8] 0, 128
    %618 = vxpose.xlu0.c.b16.cont [3/8] 0, 128
    %619 = vxpose.xlu0.c.b16.cont [4/8] 0, 128
    %620 = vxpose.xlu0.c.b16.cont [5/8] 0, 128
    %621 = vxpose.xlu0.c.b16.cont [6/8] 0, 128
    %622 = vxpose.xlu0.c.b16.cont [7/8] 0, 128
    %623 = vxpose.xlu0.c.b16.end [8/8] 0, 128
    %v624 = vpop.trf.xlu0
    %v625 = vpop.trf.xlu0
    %v626 = vpop.trf.xlu0
    %v627 = vpop.trf.xlu0
    %v628 = vpop.trf.xlu0
    %v629 = vpop.trf.xlu0
    %v630 = vpop.trf.xlu0
    %v631 = vpop.trf.xlu0
    %v633 = vsel %vm267, %v624, 0
    %v636 = vsel %vm267, %v625, 0
    %v639 = vsel %vm274, %v614, 0
    %641 = vmatpush.bf16.msra.mxu0 0
    %642 = vmatpush.bf16.msra.mxu0 0
    %643 = vmatpush.bf16.msra.mxu0 0
    %644 = vmatpush.bf16.msra.mxu0 0
    %645 = vmatpush.bf16.msra.mxu0 0
    %646 = vmatpush.bf16.msra.mxu0 0
    %647 = vmatpush.bf16.msra.mxu0 0
    %648 = vmatpush.bf16.msra.mxu0 %v639
    %649 = vmatmul.bf16.gmra.mxu0 %v633
    %v650 = vpop.f32.mrf.mxu0
    %v651 = vadd.f32 %v244, %v650
    %v652 = vpop.f32.mrf.mxu0
    %v653 = vadd.f32 %v245, %v652
    %654 = vmatmul.bf16.gmra.mxu0 %v636
    %v655 = vpop.f32.mrf.mxu0
    %v656 = vadd.f32 %v246, %v655
    %v657 = vpop.f32.mrf.mxu0
    %v658 = vadd.f32 %v247, %v657
    %659 = vdwg.mxu0
    %v660 = vsel %vm186, %v651, -inf
    %661 = vmax.xlane.f32.xlu0 %v660
    %v662 = vpop.xlane.xlu0 %661
    %v663 = vsel %vm186, %v653, -inf
    %664 = vmax.xlane.f32.xlu0 %v663
    %v665 = vpop.xlane.xlu0 %664
    %v666 = vsel %vm186, %v656, -inf
    %667 = vmax.xlane.f32.xlu0 %v666
    %v668 = vpop.xlane.xlu0 %667
    %v669 = vsel %vm186, %v658, -inf
    %670 = vmax.xlane.f32.xlu0 %v669
    %v671 = vpop.xlane.xlu0 %670
    %v672 = vsub.f32 %v651, %v662
    %v673 = vsub.f32 %v653, %v665
    %v674 = vsub.f32 %v656, %v668
    %v675 = vsub.f32 %v658, %v671
    %v676 = vmul.f32 %v672, 1.442695
    %v677 = vpow.pop %v676
    %v678 = vmul.f32 %v673, 1.442695
    %v679 = vpow.pop %v678
    %v680 = vmul.f32 %v674, 1.442695
    %v681 = vpow.pop %v680
    %v682 = vmul.f32 %v675, 1.442695
    %v683 = vpow.pop %v682
    %v684 = vsel %vm186, %v677, 0.0
    %685 = vadd.xlane.f32.xlu0 %v684
    %v686 = vpop.xlane.xlu0 %685
    %v687 = vsel %vm186, %v679, 0.0
    %688 = vadd.xlane.f32.xlu0 %v687
    %v689 = vpop.xlane.xlu0 %688
    %v690 = vsel %vm186, %v681, 0.0
    %691 = vadd.xlane.f32.xlu0 %v690
    %v692 = vpop.xlane.xlu0 %691
    %v693 = vsel %vm186, %v683, 0.0
    %694 = vadd.xlane.f32.xlu0 %v693
    %v695 = vpop.xlane.xlu0 %694
    %v696 = vrcp.pop %v686
    %v697 = vrcp.pop %v689
    %v698 = vrcp.pop %v692
    %v699 = vrcp.pop %v695
    %v700 = vmul.f32 %v677, %v696
    %v701 = vmul.f32 %v679, %v697
    %v702 = vmul.f32 %v681, %v698
    %v703 = vmul.f32 %v683, %v699
    %v704 = vpack.c.bf16 %v701, %v700
    %v705 = vpack.c.bf16 %v703, %v702
    %v707 = vsel %vm186, %v704, 0
    %v710 = vsel %vm186, %v705, 0
    %v713 = vsel %vm186, %v615, 0
    %715 = vmatpush.bf16.xpose.msra.mxu0 0
    %716 = vmatpush.bf16.xpose.msra.mxu0 0
    %717 = vmatpush.bf16.xpose.msra.mxu0 0
    %718 = vmatpush.bf16.xpose.msra.mxu0 0
    %719 = vmatpush.bf16.xpose.msra.mxu0 0
    %720 = vmatpush.bf16.xpose.msra.mxu0 0
    %721 = vmatpush.bf16.xpose.msra.mxu0 0
    %722 = vmatpush.bf16.xpose.msra.mxu0 %v713
    %723 = vmatmul.bf16.gmra.mxu0 %v707
    %v724 = vpop.f32.mrf.mxu0
    %v725 = vadd.f32 0.0, %v724
    %v726 = vpop.f32.mrf.mxu0
    %v727 = vadd.f32 0.0, %v726
    %728 = vmatmul.bf16.gmra.mxu0 %v710
    %v729 = vpop.f32.mrf.mxu0
    %v730 = vadd.f32 0.0, %v729
    %v731 = vpop.f32.mrf.mxu0
    %v732 = vadd.f32 0.0, %v731
    %733 = vdwg.mxu0
    %738 = vrot.lane.b32.xlu0 %v483, 8
    %v739 = vpop.permute.xlu0 %738
    %740 = vrot.lane.b32.xlu0 %v485, 8
    %v741 = vpop.permute.xlu0 %740
    %742 = vrot.lane.b32.xlu0 %v488, 8
    %v743 = vpop.permute.xlu0 %742
    %744 = vrot.lane.b32.xlu0 %v490, 8
    %v745 = vpop.permute.xlu0 %744
    %754 = vrot.lane.b32.xlu0 %v604, 16
    %v755 = vpop.permute.xlu0 %754
    %756 = vrot.lane.b32.xlu0 %v606, 16
    %v757 = vpop.permute.xlu0 %756
    %758 = vrot.lane.b32.xlu0 %v609, 16
    %v759 = vpop.permute.xlu0 %758
    %760 = vrot.lane.b32.xlu0 %v611, 16
    %v761 = vpop.permute.xlu0 %760
    %770 = vrot.lane.b32.xlu0 %v725, 24
    %v771 = vpop.permute.xlu0 %770
    %772 = vrot.lane.b32.xlu0 %v727, 24
    %v773 = vpop.permute.xlu0 %772
    %774 = vrot.lane.b32.xlu0 %v730, 24
    %v775 = vpop.permute.xlu0 %774
    %776 = vrot.lane.b32.xlu0 %v732, 24
    %v777 = vpop.permute.xlu0 %776
    %v782 = vsel %vm267, %v362, %v739
    %v783 = vsel %vm267, %v364, %v741
    %v784 = vsel %vm267, %v367, %v743
    %v785 = vsel %vm267, %v369, %v745
    %vm786 = vcmask 130048
    %v787 = vsel %vm786, %v782, %v755
    %v788 = vsel %vm786, %v783, %v757
    %v789 = vsel %vm786, %v784, %v759
    %v790 = vsel %vm786, %v785, %v761
    %vm791 = vcmask 195584
    %v792 = vsel %vm791, %v787, %v771
    %v793 = vsel %vm791, %v788, %v773
    %v794 = vsel %vm791, %v789, %v775
    %v795 = vsel %vm791, %v790, %v777
    %v796 = vpack.c.bf16 %v793, %v792
    %v797 = vpack.c.bf16 %v795, %v794
    %v798 = vld [vmem:[%s5] sm:$0xf]
    %v799 = vld [vmem:[%s5 + $0x4] sm:$0xf]
    %v800 = vld [vmem:[%s5 + $0x8] sm:$0xf]
    %v801 = vld [vmem:[%s5 + $0xc] sm:$0xf]
    %v802 = vld [vmem:[%s6] sm:$0x1]
    %v804 = vperm.slane %v802, 0
    %v810 = vunpack.c.l.b16 %v798
    %v811 = vunpack.c.l.b16 %v799
    %v812 = vunpack.c.l.b16 %v800
    %v813 = vunpack.c.l.b16 %v801
    %v814 = vpack.c.b16 %v811, %v810
    %v815 = vpack.c.b16 %v813, %v812
    %v819 = vsel %vm186, %v796, 0
    %v822 = vsel %vm186, %v797, 0
    %824 = vmatpush.bf16.msra.mxu0 0
    %825 = vmatpush.bf16.msra.mxu0 0
    %826 = vmatpush.bf16.msra.mxu0 0
    %827 = vmatpush.bf16.msra.mxu0 0
    %828 = vmatpush.bf16.msra.mxu0 0
    %829 = vmatpush.bf16.msra.mxu0 0
    %830 = vmatpush.bf16.msra.mxu0 %v815
    %831 = vmatpush.bf16.msra.mxu0 %v814
    %832 = vmatmul.bf16.gmra.mxu0 %v819
    %v833 = vpop.f32.mrf.mxu0
    %v834 = vadd.f32 %v804, %v833
    %v835 = vpop.f32.mrf.mxu0
    %v836 = vadd.f32 %v804, %v835
    %837 = vmatmul.bf16.gmra.mxu0 %v822
    %v838 = vpop.f32.mrf.mxu0
    %v839 = vadd.f32 %v804, %v838
    %v840 = vpop.f32.mrf.mxu0
    %v841 = vadd.f32 %v804, %v840
    %842 = vdwg.mxu0
    %v843 = vadd.f32 %v52, %v834
    %v844 = vadd.f32 %v53, %v836
    %v845 = vadd.f32 %v54, %v839
    %v846 = vadd.f32 %v55, %v841
    %v847 = vld [vmem:[%s11] sm:$0x1]
    %v848 = vld [vmem:[%s12] sm:$0x1]
    %v849 = vsel %vm186, %v843, 0.0
    %850 = vadd.xlane.f32.xlu0 %v849
    %v851 = vpop.xlane.xlu0 %850
    %v852 = vsel %vm186, %v844, 0.0
    %853 = vadd.xlane.f32.xlu0 %v852
    %v854 = vpop.xlane.xlu0 %853
    %v855 = vsel %vm186, %v845, 0.0
    %856 = vadd.xlane.f32.xlu0 %v855
    %v857 = vpop.xlane.xlu0 %856
    %v858 = vsel %vm186, %v846, 0.0
    %859 = vadd.xlane.f32.xlu0 %v858
    %v860 = vpop.xlane.xlu0 %859
    %v861 = vrcp.pop 32.0
    %v862 = vmul.f32 32.0, %v861
    %v863 = vsub.f32 1.0, %v862
    %v864 = vmul.f32 %v861, %v863
    %v865 = vadd.f32 %v861, %v864
    %vm866 = vweird.f32 %v861
    %v867 = vsel %vm866, %v861, %v865
    %v868 = vmul.f32 %v851, %v867
    %v869 = vmul.f32 %v854, %v867
    %v870 = vmul.f32 %v857, %v867
    %v871 = vmul.f32 %v860, %v867
    %v872 = vsub.f32 %v843, %v868
    %v873 = vsub.f32 %v844, %v869
    %v874 = vsub.f32 %v845, %v870
    %v875 = vsub.f32 %v846, %v871
    %v876 = vmul.f32 %v872, %v872
    %v877 = vmul.f32 %v873, %v873
    %v878 = vmul.f32 %v874, %v874
    %v879 = vmul.f32 %v875, %v875
    %v880 = vsel %vm186, %v876, 0.0
    %881 = vadd.xlane.f32.xlu0 %v880
    %v882 = vpop.xlane.xlu0 %881
    %v883 = vsel %vm186, %v877, 0.0
    %884 = vadd.xlane.f32.xlu0 %v883
    %v885 = vpop.xlane.xlu0 %884
    %v886 = vsel %vm186, %v878, 0.0
    %887 = vadd.xlane.f32.xlu0 %v886
    %v888 = vpop.xlane.xlu0 %887
    %v889 = vsel %vm186, %v879, 0.0
    %890 = vadd.xlane.f32.xlu0 %v889
    %v891 = vpop.xlane.xlu0 %890
    %v892 = vmul.f32 %v882, %v867
    %v893 = vmul.f32 %v885, %v867
    %v894 = vmul.f32 %v888, %v867
    %v895 = vmul.f32 %v891, %v867
    %v896 = vadd.f32 %v892, 1e-05
    %v897 = vadd.f32 %v893, 1e-05
    %v898 = vadd.f32 %v894, 1e-05
    %v899 = vadd.f32 %v895, 1e-05
    %v900 = vrsqrt.pop %v896
    %v901 = vmul.f32 %v900, %v896
    %v902 = vmul.f32 %v901, %v900
    %v903 = vmul.f32 0.5, %v902
    %v904 = vsub.f32 1.5, %v903
    %v905 = vmul.f32 %v900, %v904
    %vm906 = vweird.f32 %v896
    %vm907 = vweird.f32 %v900
    %vm908 = vmor %vm906, %vm907
    %v909 = vsel %vm908, %v900, %v905
    %v910 = vrsqrt.pop %v897
    %v911 = vmul.f32 %v910, %v897
    %v912 = vmul.f32 %v911, %v910
    %v913 = vmul.f32 0.5, %v912
    %v914 = vsub.f32 1.5, %v913
    %v915 = vmul.f32 %v910, %v914
    %vm916 = vweird.f32 %v897
    %vm917 = vweird.f32 %v910
    %vm918 = vmor %vm916, %vm917
    %v919 = vsel %vm918, %v910, %v915
    %v920 = vrsqrt.pop %v898
    %v921 = vmul.f32 %v920, %v898
    %v922 = vmul.f32 %v921, %v920
    %v923 = vmul.f32 0.5, %v922
    %v924 = vsub.f32 1.5, %v923
    %v925 = vmul.f32 %v920, %v924
    %vm926 = vweird.f32 %v898
    %vm927 = vweird.f32 %v920
    %vm928 = vmor %vm926, %vm927
    %v929 = vsel %vm928, %v920, %v925
    %v930 = vrsqrt.pop %v899
    %v931 = vmul.f32 %v930, %v899
    %v932 = vmul.f32 %v931, %v930
    %v933 = vmul.f32 0.5, %v932
    %v934 = vsub.f32 1.5, %v933
    %v935 = vmul.f32 %v930, %v934
    %vm936 = vweird.f32 %v899
    %vm937 = vweird.f32 %v930
    %vm938 = vmor %vm936, %vm937
    %v939 = vsel %vm938, %v930, %v935
    %v940 = vmul.f32 %v872, %v909
    %v941 = vmul.f32 %v873, %v919
    %v942 = vmul.f32 %v874, %v929
    %v943 = vmul.f32 %v875, %v939
    %v945 = vperm.slane %v847, 0
    %v947 = vmul.f32 %v940, %v945
    %v948 = vmul.f32 %v941, %v945
    %v949 = vmul.f32 %v942, %v945
    %v950 = vmul.f32 %v943, %v945
    %v952 = vperm.slane %v848, 0
    %v954 = vadd.f32 %v947, %v952
    %v955 = vadd.f32 %v948, %v952
    %v956 = vadd.f32 %v949, %v952
    %v957 = vadd.f32 %v950, %v952
    %v958 = vpack.c.bf16 %v955, %v954
    %v959 = vpack.c.bf16 %v957, %v956
    %v960 = vld [vmem:[%s7] sm:$0xf]
    %v961 = vld [vmem:[%s7 + $0x4] sm:$0xf]
    %v962 = vld [vmem:[%s7 + $0x8] sm:$0xf]
    %v963 = vld [vmem:[%s7 + $0xc] sm:$0xf]
    %v964 = vld [vmem:[%s8] sm:$0x1]
    %v966 = vperm.slane %v964, 0
    %v972 = vunpack.c.l.b16 %v960
    %v973 = vunpack.c.l.b16 %v961
    %v974 = vunpack.c.l.b16 %v962
    %v975 = vunpack.c.l.b16 %v963
    %v976 = vpack.c.b16 %v973, %v972
    %v977 = vpack.c.b16 %v975, %v974
    %v981 = vsel %vm186, %v958, 0
    %v984 = vsel %vm186, %v959, 0
    %986 = vmatpush.bf16.msra.mxu0 0
    %987 = vmatpush.bf16.msra.mxu0 0
    %988 = vmatpush.bf16.msra.mxu0 0
    %989 = vmatpush.bf16.msra.mxu0 0
    %990 = vmatpush.bf16.msra.mxu0 0
    %991 = vmatpush.bf16.msra.mxu0 0
    %992 = vmatpush.bf16.msra.mxu0 %v977
    %993 = vmatpush.bf16.msra.mxu0 %v976
    %994 = vmatmul.bf16.gmra.mxu0 %v981
    %v995 = vpop.f32.mrf.mxu0
    %v996 = vadd.f32 %v966, %v995
    %v997 = vpop.f32.mrf.mxu0
    %v998 = vadd.f32 %v966, %v997
    %999 = vmatmul.bf16.gmra.mxu0 %v984
    %v1000 = vpop.f32.mrf.mxu0
    %v1001 = vadd.f32 %v966, %v1000
    %v1002 = vpop.f32.mrf.mxu0
    %v1003 = vadd.f32 %v966, %v1002
    %1004 = vdwg.mxu0
    %v1005 = vmax.f32 %v996, 0.0
    %v1006 = vmax.f32 %v998, 0.0
    %v1007 = vmax.f32 %v1001, 0.0
    %v1008 = vmax.f32 %v1003, 0.0
    %v1009 = vpack.c.bf16 %v1006, %v1005
    %v1010 = vpack.c.bf16 %v1008, %v1007
    %v1011 = vld [vmem:[%s9] sm:$0xf]
    %v1012 = vld [vmem:[%s9 + $0x4] sm:$0xf]
    %v1013 = vld [vmem:[%s9 + $0x8] sm:$0xf]
    %v1014 = vld [vmem:[%s9 + $0xc] sm:$0xf]
    %v1015 = vld [vmem:[%s9 + $0x10] sm:$0xf]
    %v1016 = vld [vmem:[%s9 + $0x14] sm:$0xf]
    %v1017 = vld [vmem:[%s9 + $0x18] sm:$0xf]
    %v1018 = vld [vmem:[%s9 + $0x1c] sm:$0xf]
    %v1019 = vld [vmem:[%s9 + $0x20] sm:$0xf]
    %v1020 = vld [vmem:[%s9 + $0x24] sm:$0xf]
    %v1021 = vld [vmem:[%s9 + $0x28] sm:$0xf]
    %v1022 = vld [vmem:[%s9 + $0x2c] sm:$0xf]
    %v1023 = vld [vmem:[%s9 + $0x30] sm:$0xf]
    %v1024 = vld [vmem:[%s9 + $0x34] sm:$0xf]
    %v1025 = vld [vmem:[%s9 + $0x38] sm:$0xf]
    %v1026 = vld [vmem:[%s9 + $0x3c] sm:$0xf]
    %v1027 = vld [vmem:[%s10] sm:$0x1]
    %v1029 = vperm.slane %v1027, 0
    %v1047 = vunpack.c.l.b16 %v1011
    %v1048 = vunpack.c.l.b16 %v1012
    %v1049 = vunpack.c.l.b16 %v1013
    %v1050 = vunpack.c.l.b16 %v1014
    %v1051 = vunpack.c.l.b16 %v1015
    %v1052 = vunpack.c.l.b16 %v1016
    %v1053 = vunpack.c.l.b16 %v1017
    %v1054 = vunpack.c.l.b16 %v1018
    %v1055 = vunpack.c.l.b16 %v1019
    %v1056 = vunpack.c.l.b16 %v1020
    %v1057 = vunpack.c.l.b16 %v1021
    %v1058 = vunpack.c.l.b16 %v1022
    %v1059 = vunpack.c.l.b16 %v1023
    %v1060 = vunpack.c.l.b16 %v1024
    %v1061 = vunpack.c.l.b16 %v1025
    %v1062 = vunpack.c.l.b16 %v1026
    %v1063 = vpack.c.b16 %v1048, %v1047
    %v1064 = vpack.c.b16 %v1050, %v1049
    %v1065 = vpack.c.b16 %v1052, %v1051
    %v1066 = vpack.c.b16 %v1054, %v1053
    %v1067 = vpack.c.b16 %v1056, %v1055
    %v1068 = vpack.c.b16 %v1058, %v1057
    %v1069 = vpack.c.b16 %v1060, %v1059
    %v1070 = vpack.c.b16 %v1062, %v1061
    %1079 = vmatpush.bf16.msra.mxu0 %v1070
    %1080 = vmatpush.bf16.msra.mxu0 %v1069
    %1081 = vmatpush.bf16.msra.mxu0 %v1068
    %1082 = vmatpush.bf16.msra.mxu0 %v1067
    %1083 = vmatpush.bf16.msra.mxu0 %v1066
    %1084 = vmatpush.bf16.msra.mxu0 %v1065
    %1085 = vmatpush.bf16.msra.mxu0 %v1064
    %1086 = vmatpush.bf16.msra.mxu0 %v1063
    %1087 = vmatmul.bf16.gmra.mxu0 %v1009
    %v1088 = vpop.f32.mrf.mxu0
    %v1089 = vadd.f32 %v1029, %v1088
    %v1090 = vpop.f32.mrf.mxu0
    %v1091 = vadd.f32 %v1029, %v1090
    %1092 = vmatmul.bf16.gmra.mxu0 %v1010
    %v1093 = vpop.f32.mrf.mxu0
    %v1094 = vadd.f32 %v1029, %v1093
    %v1095 = vpop.f32.mrf.mxu0
    %v1096 = vadd.f32 %v1029, %v1095
    %1097 = vdwg.mxu0
    %v1098 = vadd.f32 %v954, %v1089
    %v1099 = vadd.f32 %v955, %v1091
    %v1100 = vadd.f32 %v956, %v1094
    %v1101 = vadd.f32 %v957, %v1096
    %v1102 = vld [vmem:[%s13] sm:$0x1]
    %v1103 = vld [vmem:[%s14] sm:$0x1]
    %v1104 = vsel %vm186, %v1098, 0.0
    %1105 = vadd.xlane.f32.xlu0 %v1104
    %v1106 = vpop.xlane.xlu0 %1105
    %v1107 = vsel %vm186, %v1099, 0.0
    %1108 = vadd.xlane.f32.xlu0 %v1107
    %v1109 = vpop.xlane.xlu0 %1108
    %v1110 = vsel %vm186, %v1100, 0.0
    %1111 = vadd.xlane.f32.xlu0 %v1110
    %v1112 = vpop.xlane.xlu0 %1111
    %v1113 = vsel %vm186, %v1101, 0.0
    %1114 = vadd.xlane.f32.xlu0 %v1113
    %v1115 = vpop.xlane.xlu0 %1114
    %v1116 = vmul.f32 %v1106, %v867
    %v1117 = vmul.f32 %v1109, %v867
    %v1118 = vmul.f32 %v1112, %v867
    %v1119 = vmul.f32 %v1115, %v867
    %v1120 = vsub.f32 %v1098, %v1116
    %v1121 = vsub.f32 %v1099, %v1117
    %v1122 = vsub.f32 %v1100, %v1118
    %v1123 = vsub.f32 %v1101, %v1119
    %v1124 = vmul.f32 %v1120, %v1120
    %v1125 = vmul.f32 %v1121, %v1121
    %v1126 = vmul.f32 %v1122, %v1122
    %v1127 = vmul.f32 %v1123, %v1123
    %v1128 = vsel %vm186, %v1124, 0.0
    %1129 = vadd.xlane.f32.xlu0 %v1128
    %v1130 = vpop.xlane.xlu0 %1129
    %v1131 = vsel %vm186, %v1125, 0.0
    %1132 = vadd.xlane.f32.xlu0 %v1131
    %v1133 = vpop.xlane.xlu0 %1132
    %v1134 = vsel %vm186, %v1126, 0.0
    %1135 = vadd.xlane.f32.xlu0 %v1134
    %v1136 = vpop.xlane.xlu0 %1135
    %v1137 = vsel %vm186, %v1127, 0.0
    %1138 = vadd.xlane.f32.xlu0 %v1137
    %v1139 = vpop.xlane.xlu0 %1138
    %v1140 = vmul.f32 %v1130, %v867
    %v1141 = vmul.f32 %v1133, %v867
    %v1142 = vmul.f32 %v1136, %v867
    %v1143 = vmul.f32 %v1139, %v867
    %v1144 = vadd.f32 %v1140, 1e-05
    %v1145 = vadd.f32 %v1141, 1e-05
    %v1146 = vadd.f32 %v1142, 1e-05
    %v1147 = vadd.f32 %v1143, 1e-05
    %v1148 = vrsqrt.pop %v1144
    %v1149 = vmul.f32 %v1148, %v1144
    %v1150 = vmul.f32 %v1149, %v1148
    %v1151 = vmul.f32 0.5, %v1150
    %v1152 = vsub.f32 1.5, %v1151
    %v1153 = vmul.f32 %v1148, %v1152
    %vm1154 = vweird.f32 %v1144
    %vm1155 = vweird.f32 %v1148
    %vm1156 = vmor %vm1154, %vm1155
    %v1157 = vsel %vm1156, %v1148, %v1153
    %v1158 = vrsqrt.pop %v1145
    %v1159 = vmul.f32 %v1158, %v1145
    %v1160 = vmul.f32 %v1159, %v1158
    %v1161 = vmul.f32 0.5, %v1160
    %v1162 = vsub.f32 1.5, %v1161
    %v1163 = vmul.f32 %v1158, %v1162
    %vm1164 = vweird.f32 %v1145
    %vm1165 = vweird.f32 %v1158
    %vm1166 = vmor %vm1164, %vm1165
    %v1167 = vsel %vm1166, %v1158, %v1163
    %v1168 = vrsqrt.pop %v1146
    %v1169 = vmul.f32 %v1168, %v1146
    %v1170 = vmul.f32 %v1169, %v1168
    %v1171 = vmul.f32 0.5, %v1170
    %v1172 = vsub.f32 1.5, %v1171
    %v1173 = vmul.f32 %v1168, %v1172
    %vm1174 = vweird.f32 %v1146
    %vm1175 = vweird.f32 %v1168
    %vm1176 = vmor %vm1174, %vm1175
    %v1177 = vsel %vm1176, %v1168, %v1173
    %v1178 = vrsqrt.pop %v1147
    %v1179 = vmul.f32 %v1178, %v1147
    %v1180 = vmul.f32 %v1179, %v1178
    %v1181 = vmul.f32 0.5, %v1180
    %v1182 = vsub.f32 1.5, %v1181
    %v1183 = vmul.f32 %v1178, %v1182
    %vm1184 = vweird.f32 %v1147
    %vm1185 = vweird.f32 %v1178
    %vm1186 = vmor %vm1184, %vm1185
    %v1187 = vsel %vm1186, %v1178, %v1183
    %v1188 = vmul.f32 %v1120, %v1157
    %v1189 = vmul.f32 %v1121, %v1167
    %v1190 = vmul.f32 %v1122, %v1177
    %v1191 = vmul.f32 %v1123, %v1187
    %v1193 = vperm.slane %v1102, 0
    %v1195 = vmul.f32 %v1188, %v1193
    %v1196 = vmul.f32 %v1189, %v1193
    %v1197 = vmul.f32 %v1190, %v1193
    %v1198 = vmul.f32 %v1191, %v1193
    %v1200 = vperm.slane %v1103, 0
    %v1202 = vadd.f32 %v1195, %v1200
    %v1203 = vadd.f32 %v1196, %v1200
    %v1204 = vadd.f32 %v1197, %v1200
    %v1205 = vadd.f32 %v1198, %v1200
    %1206 = vst.msk [vmem:[#allocation2] sm:$0xff] %vm186, %v1202
    %1207 = vst.msk [vmem:[#allocation2 + $0x8] sm:$0xff] %vm186, %v1203
    %1208 = vst.msk [vmem:[#allocation2 + $0x10] sm:$0xff] %vm186, %v1204
    %1209 = vst.msk [vmem:[#allocation2 + $0x18] sm:$0xff] %vm186, %v1205
    // Predicated region
    $region62: #{tpu_custom_call.1} parent=1 // pred_check
      _
    $region63: #{tpu_custom_call.1} parent=1 // pred_check_branch
      %1211 = sbr.rel (0) target = $region65
    $region64: #{tpu_custom_call.1} parent=1 // pred_region
      %1213 = vsyncadd [#allocation3], 0
      %s1214 = sshll.u32 [#allocation2], 4
      %s1215 = int_to_ptr.vmem [resolvable:$true] %s1214
      %s1216 = sshll.u32 %s15, 4
      %s1217 = int_to_ptr.hbm [resolvable:$true] %s1216
      %1222 = dma.vmem_to_hbm [thread:$0]  %s1215, 512, %s1217, [#allocation3], 128, 128, 8
    $region65: #{tpu_custom_call.1} parent=1 // pred_fallthru
      _
    // Predicated region
    $region66: #{tpu_custom_call.1} parent=1 // pred_check
      _
    $region67: #{tpu_custom_call.1} parent=1 // pred_check_branch
      %1224 = sbr.rel (0) target = $region69
    $region68: #{tpu_custom_call.1} parent=1 // pred_region
      %1226 = dma.done [#allocation3], 512
    $region69: #{tpu_custom_call.1} parent=1 // pred_fallthru
      _
    %1227 = vsyncpa [#allocation3], 1

</llo_original>
